<compile_context>
chip_gen: v6e
topology: v6e:2x2x1
jax: 0.10.0
libtpu: 0.0.40
codegen_flags: <defaults>
</compile_context>

<pallas_src>
import jax
import jax.numpy as jnp
from jax import lax
from jax.experimental import pallas as pl
from jax.experimental.pallas import tpu as pltpu


def _pointnet_kernel(x_ref, w_ref, bias_ref, mask_ref, o_ref):
    # x_ref:    (TB, TN, idims)   bf16 points tile (channels-last)
    # w_ref:    (odims, idims)    bf16 conv1d weight with BN scale folded in
    # bias_ref: (odims, 1)        f32 folded BN bias
    # mask_ref: (TB, 1, TN)       f32 mask, broadcast along sublanes (odims)
    # o_ref:    (TB, odims, TN)   output tile, lane-dense along TN
    w = w_ref[...]                                     # (odims, idims)
    bias = bias_ref[...]                               # (odims, 1)
    tb = x_ref.shape[0]
    # Small static unroll over the batch tile; each iteration is one MXU call
    # whose (odims, TN) result is stored immediately (short live ranges).
    for b in range(tb):
        x = x_ref[b]                                   # (TN, idims)
        # (odims, idims) x (TN, idims), contracting idims -> (odims, TN).
        # NOTE: the RHS contraction is on its last dim; if bundle dumps show
        # an exposed vxpose for large idims, revisit the operand layout.
        y = lax.dot_general(
            w, x,
            dimension_numbers=(((1,), (1,)), ((), ())),
            preferred_element_type=jnp.float32)
        y = jnp.maximum(y + bias, 0.0)                 # BN bias + ReLU (f32)
        y = y * mask_ref[b]                            # (1, TN) broadcast
        o_ref[b] = y.astype(o_ref.dtype)


def pointnet_forward(points_feature, points_mask, weight, gamma, beta,
                     running_mean, running_var, eps=1e-5,
                     tile_n=8192, tile_b=None,
                     compute_dtype=jnp.bfloat16, out_dtype=jnp.bfloat16):
    """points_feature: (B, N, idims), points_mask: (B, N).
    weight: (odims, idims) (Conv1d weight with the trailing k=1 squeezed).
    Returns (B, odims, N) in out_dtype (default bf16 for HBM-traffic reasons;
    pass out_dtype=jnp.float32 for bit-closer parity with the PyTorch f32
    module)."""
    B, N, idims = points_feature.shape
    odims = weight.shape[0]

    # Fold BatchNorm (eval mode): scale into the weight, keep only the bias.
    scale = gamma / jnp.sqrt(running_var + eps)                    # (odims,)
    bias = (beta - running_mean * scale).reshape(odims, 1).astype(jnp.float32)
    w_scaled = (weight * scale[:, None]).astype(compute_dtype)     # (odims, idims)

    x = points_feature.astype(compute_dtype)
    mask3 = points_mask.reshape(B, 1, N).astype(jnp.float32)

    # --- Tiling ---------------------------------------------------------
    # Point tile: as large as possible (clamped to N, 128-lane aligned when
    # tiling) so each grid step moves >> 0.35 us worth of HBM data.
    tile_n = min(tile_n, N)
    if tile_n != N and tile_n % 128 != 0:
        tile_n = max(128, (tile_n // 128) * 128)
    # Batch tile: when N is small (real PointPillars regime), pack several
    # batch elements per grid step so steps stay ~8K points; cap at 16.
    if tile_b is None:
        tile_b = max(1, min(B, 8192 // max(tile_n, 1), 16))
    tile_b = max(1, min(tile_b, B))
    grid = (pl.cdiv(B, tile_b), pl.cdiv(N, tile_n))

    in_isz = jnp.dtype(compute_dtype).itemsize
    out_isz = jnp.dtype(out_dtype).itemsize

    # Double-buffered VMEM footprint estimate (+ headroom), capped for v7x's
    # 64 MiB physical VMEM.
    tile_bytes = (tile_b * tile_n * idims * in_isz       # x tile
                  + tile_b * tile_n * 4                  # mask tile
                  + tile_b * odims * tile_n * out_isz)   # out tile
    vmem_limit = min(max(32 << 20, 2 * tile_bytes + (4 << 20)), 64 << 20)

    flops = 2 * B * N * idims * odims
    bytes_accessed = (B * N * idims * in_isz            # x
                      + odims * idims * in_isz          # weight
                      + odims * 4                       # bias
                      + B * N * 4                       # mask
                      + B * odims * N * out_isz)        # output

    out = pl.pallas_call(
        _pointnet_kernel,
        out_shape=jax.ShapeDtypeStruct((B, odims, N), out_dtype),
        grid=grid,
        in_specs=[
            pl.BlockSpec((tile_b, tile_n, idims), lambda b, n: (b, n, 0)),
            pl.BlockSpec((odims, idims), lambda b, n: (0, 0)),
            pl.BlockSpec((odims, 1), lambda b, n: (0, 0)),
            pl.BlockSpec((tile_b, 1, tile_n), lambda b, n: (b, 0, n)),
        ],
        out_specs=pl.BlockSpec((tile_b, odims, tile_n), lambda b, n: (b, 0, n)),
        compiler_params=pltpu.CompilerParams(
            dimension_semantics=("parallel", "parallel"),
            vmem_limit_bytes=vmem_limit),
        cost_estimate=pl.CostEstimate(
            flops=flops, transcendentals=0, bytes_accessed=bytes_accessed),
    )(x, w_scaled, bias, mask3)
    return out


def _reference(points_feature, points_mask, weight, gamma, beta,
               running_mean, running_var, eps=1e-5):
    # Pure-JAX f32 reference of the PyTorch forward (eval-mode BN).
    x = jnp.einsum('bni,oi->bon', points_feature, weight)
    scale = gamma / jnp.sqrt(running_var + eps)
    bias = beta - running_mean * scale
    x = x * scale[None, :, None] + bias[None, :, None]
    x = jnp.maximum(x, 0.0)
    return x * points_mask[:, None, :]


if __name__ == "__main__":
    idims, odims = 64, 64
    B, N = 2, 256  # small shapes consistent with the module

    key = jax.random.PRNGKey(0)
    k1, k2, k3, k4, k5, k6, k7 = jax.random.split(key, 7)

    points_feature = jax.random.normal(k1, (B, N, idims), dtype=jnp.float32)
    points_mask = (jax.random.uniform(k2, (B, N)) > 0.3).astype(jnp.float32)

    # Deterministic synthetic parameters (Conv1d weight has k=1 squeezed out).
    weight = jax.random.normal(k3, (odims, idims), dtype=jnp.float32) * 0.1
    gamma = 1.0 + 0.05 * jax.random.normal(k4, (odims,), dtype=jnp.float32)
    beta = 0.05 * jax.random.normal(k5, (odims,), dtype=jnp.float32)
    running_mean = 0.1 * jax.random.normal(k6, (odims,), dtype=jnp.float32)
    running_var = jnp.abs(1.0 + 0.1 * jax.random.normal(k7, (odims,), dtype=jnp.float32))

    out = pointnet_forward(points_feature, points_mask, weight, gamma, beta,
                           running_mean, running_var)
    out = jax.block_until_ready(out)

    ref = _reference(points_feature, points_mask, weight, gamma, beta,
                     running_mean, running_var)
    assert out.shape == (B, odims, N)
    # bf16 inputs / f32 accumulation / bf16 output store -> loosened tolerance
    # vs. the pure-f32 reference.
    assert jnp.allclose(out.astype(jnp.float32), ref, atol=3e-2, rtol=3e-2)

    print("KERNEL_OK")
</pallas_src>

<mosaic_0001>
module attributes {stable_mosaic.version = 11 : i64} {
  func.func @_pointnet_kernel(%arg0: i32, %arg1: i32, %arg2: memref<2x256x64xbf16, #tpu.memory_space<vmem>>, %arg3: memref<64x64xbf16, #tpu.memory_space<vmem>>, %arg4: memref<64x1xf32, #tpu.memory_space<vmem>>, %arg5: memref<2x1x256xf32, #tpu.memory_space<vmem>>, %arg6: memref<2x64x256xbf16, #tpu.memory_space<vmem>>) attributes {dimension_semantics = [#tpu.dimension_semantics<parallel>, #tpu.dimension_semantics<parallel>], iteration_bounds = array<i64: 1, 1>, scalar_prefetch = 0 : i64, scratch_operands = 0 : i64, tpu.core_type = #tpu.core_type<tc>, window_params = [{transform_indices = @transform_0, window_bounds = array<i64: 2, 256, 64>}, {pipeline_mode = #tpu.pipeline_mode<synchronous>, transform_indices = @transform_1, window_bounds = array<i64: 64, 64>}, {pipeline_mode = #tpu.pipeline_mode<synchronous>, transform_indices = @transform_2, window_bounds = array<i64: 64, 1>}, {transform_indices = @transform_3, window_bounds = array<i64: 2, 1, 256>}, {transform_indices = @transform_4, window_bounds = array<i64: 2, 64, 256>}]} {
    %c0 = arith.constant 0 : index
    %c0_0 = arith.constant 0 : index
    %0 = vector.load %arg3[%c0, %c0_0] : memref<64x64xbf16, #tpu.memory_space<vmem>>, vector<64x64xbf16>
    %c0_1 = arith.constant 0 : index
    %c0_2 = arith.constant 0 : index
    %1 = vector.load %arg4[%c0_1, %c0_2] : memref<64x1xf32, #tpu.memory_space<vmem>>, vector<64x1xf32>
    %c0_3 = arith.constant 0 : index
    %c0_4 = arith.constant 0 : index
    %c0_5 = arith.constant 0 : index
    %2 = vector.load %arg2[%c0_3, %c0_4, %c0_5] : memref<2x256x64xbf16, #tpu.memory_space<vmem>>, vector<1x256x64xbf16>
    %3 = vector.shape_cast %2 : vector<1x256x64xbf16> to vector<256x64xbf16>
    %cst = arith.constant dense<0.000000e+00> : vector<64x256xf32>
    %4 = tpu.matmul %0, %3, %cst {dimension_numbers = #tpu.dot_dimension_numbers<[1], [1], [0], [0], [0, 0, 1, 0], [], []>} : vector<64x64xbf16>, vector<256x64xbf16>, vector<64x256xf32> -> vector<64x256xf32>
    %5 = vector.broadcast %1 : vector<64x1xf32> to vector<64x256xf32>
    %6 = arith.addf %4, %5 : vector<64x256xf32>
    %cst_6 = arith.constant 0.000000e+00 : f32
    %7 = vector.broadcast %cst_6 : f32 to vector<64x256xf32>
    %8 = arith.maximumf %6, %7 : vector<64x256xf32>
    %c0_7 = arith.constant 0 : index
    %c0_8 = arith.constant 0 : index
    %c0_9 = arith.constant 0 : index
    %9 = vector.load %arg5[%c0_7, %c0_8, %c0_9] : memref<2x1x256xf32, #tpu.memory_space<vmem>>, vector<1x1x256xf32>
    %10 = vector.shape_cast %9 : vector<1x1x256xf32> to vector<1x256xf32>
    %11 = vector.broadcast %10 : vector<1x256xf32> to vector<64x256xf32>
    %12 = arith.mulf %8, %11 : vector<64x256xf32>
    %13 = arith.truncf %12 : vector<64x256xf32> to vector<64x256xbf16>
    %c0_10 = arith.constant 0 : index
    %c0_11 = arith.constant 0 : index
    %c0_12 = arith.constant 0 : index
    %14 = vector.load %arg6[%c0_10, %c0_11, %c0_12] : memref<2x64x256xbf16, #tpu.memory_space<vmem>>, vector<1x64x256xbf16>
    %15 = vector.shape_cast %14 : vector<1x64x256xbf16> to vector<64x256xbf16>
    %16 = vector.shape_cast %13 : vector<64x256xbf16> to vector<1x64x256xbf16>
    tpu.vector_store %arg6[%c0_10, %c0_11, %c0_12], %16 {strides = array<i32>} : memref<2x64x256xbf16, #tpu.memory_space<vmem>>, vector<1x64x256xbf16>,
    %c1 = arith.constant 1 : index
    %c0_13 = arith.constant 0 : index
    %c0_14 = arith.constant 0 : index
    %17 = vector.load %arg2[%c1, %c0_13, %c0_14] : memref<2x256x64xbf16, #tpu.memory_space<vmem>>, vector<1x256x64xbf16>
    %18 = vector.shape_cast %17 : vector<1x256x64xbf16> to vector<256x64xbf16>
    %cst_15 = arith.constant dense<0.000000e+00> : vector<64x256xf32>
    %19 = tpu.matmul %0, %18, %cst_15 {dimension_numbers = #tpu.dot_dimension_numbers<[1], [1], [0], [0], [0, 0, 1, 0], [], []>} : vector<64x64xbf16>, vector<256x64xbf16>, vector<64x256xf32> -> vector<64x256xf32>
    %20 = vector.broadcast %1 : vector<64x1xf32> to vector<64x256xf32>
    %21 = arith.addf %19, %20 : vector<64x256xf32>
    %cst_16 = arith.constant 0.000000e+00 : f32
    %22 = vector.broadcast %cst_16 : f32 to vector<64x256xf32>
    %23 = arith.maximumf %21, %22 : vector<64x256xf32>
    %c1_17 = arith.constant 1 : index
    %c0_18 = arith.constant 0 : index
    %c0_19 = arith.constant 0 : index
    %24 = vector.load %arg5[%c1_17, %c0_18, %c0_19] : memref<2x1x256xf32, #tpu.memory_space<vmem>>, vector<1x1x256xf32>
    %25 = vector.shape_cast %24 : vector<1x1x256xf32> to vector<1x256xf32>
    %26 = vector.broadcast %25 : vector<1x256xf32> to vector<64x256xf32>
    %27 = arith.mulf %23, %26 : vector<64x256xf32>
    %28 = arith.truncf %27 : vector<64x256xf32> to vector<64x256xbf16>
    %c1_20 = arith.constant 1 : index
    %c0_21 = arith.constant 0 : index
    %c0_22 = arith.constant 0 : index
    %29 = vector.load %arg6[%c1_20, %c0_21, %c0_22] : memref<2x64x256xbf16, #tpu.memory_space<vmem>>, vector<1x64x256xbf16>
    %30 = vector.shape_cast %29 : vector<1x64x256xbf16> to vector<64x256xbf16>
    %31 = vector.shape_cast %28 : vector<64x256xbf16> to vector<1x64x256xbf16>
    tpu.vector_store %arg6[%c1_20, %c0_21, %c0_22], %31 {strides = array<i32>} : memref<2x64x256xbf16, #tpu.memory_space<vmem>>, vector<1x64x256xbf16>,
    return
  }
  func.func @transform_0(%arg0: i32, %arg1: i32) -> (i32, i32, i32) {
    %c0_i32 = arith.constant 0 : i32
    %c0_i32_0 = arith.constant 0 : i32
    return %arg0, %arg1, %c0_i32 : i32, i32, i32
  }
  func.func @transform_1(%arg0: i32, %arg1: i32) -> (i32, i32) {
    %c0_i32 = arith.constant 0 : i32
    %c0_i32_0 = arith.constant 0 : i32
    %c0_i32_1 = arith.constant 0 : i32
    return %c0_i32, %c0_i32_0 : i32, i32
  }
  func.func @transform_2(%arg0: i32, %arg1: i32) -> (i32, i32) {
    %c0_i32 = arith.constant 0 : i32
    %c0_i32_0 = arith.constant 0 : i32
    %c0_i32_1 = arith.constant 0 : i32
    return %c0_i32, %c0_i32_0 : i32, i32
  }
  func.func @transform_3(%arg0: i32, %arg1: i32) -> (i32, i32, i32) {
    %c0_i32 = arith.constant 0 : i32
    %c0_i32_0 = arith.constant 0 : i32
    return %arg0, %c0_i32, %arg1 : i32, i32, i32
  }
  func.func @transform_4(%arg0: i32, %arg1: i32) -> (i32, i32, i32) {
    %c0_i32 = arith.constant 0 : i32
    %c0_i32_0 = arith.constant 0 : i32
    return %arg0, %c0_i32, %arg1 : i32, i32, i32
  }
}

</mosaic_0001>

<llo_original>
// kernel: tpu_custom_call.1
$region0: #{tpu_custom_call.1}
  #allocation0 [shape = 'u32[]', space=smem, size = 0x4, offset = 0x4, fixed_abs, tag = 'smem constant byte address 0x4 - core index']
  #allocation1 [shape = 'u32[144,128]{1,0:T(1,128)}', space=vmem, size = 0x12000, scoped, tag = 'internal scratch']
  %s0 = inlined_call_operand.vmem [shape: bf16[2,256,64], index: 0, kind: input, shape index: {}]
  %s1 = inlined_call_operand.vmem [shape: bf16[64,64], index: 1, kind: input, shape index: {}]
  %s2 = inlined_call_operand.vmem [shape: f32[64,1], index: 2, kind: input, shape index: {}]
  %s3 = inlined_call_operand.vmem [shape: f32[2,1,256], index: 3, kind: input, shape index: {}]
  %s4 = inlined_call_operand.hbm [shape: bf16[2,64,256], index: 4, kind: output, shape index: {}]
  %s5 = sld [smem:[#allocation0]]
  $region26: #{tpu_custom_call.1} parent=0
    _
  %s7 = ssub.s32 1, %s5
  %s8 = scalar_select 0, %s7, %s5
  $region1: #{tpu_custom_call.1} parent=0
    #allocation2 [shape = 'u8[65536]{0}', space=vmem, size = 0x10000, scoped, tag = 'output window, operand 0, single buffered']
    #allocation3 [shape = 's32[1]{0}', space=sflag, size = 0x4, scoped, tag = 'scoped memory for tpu_custom_call.1']
    %9 = vsyncpa [#allocation3], 0
    // Predicated region
    $region2: #{tpu_custom_call.1} parent=1 // pred_check
      _
    $region3: #{tpu_custom_call.1} parent=1 // pred_check_branch
      %11 = sbr.rel (0) target = $region5
    $region4: #{tpu_custom_call.1} parent=1 // pred_region
      _
    $region5: #{tpu_custom_call.1} parent=1 // pred_fallthru
      _
    // Predicated region
    $region6: #{tpu_custom_call.1} parent=1 // pred_check
      _
    $region7: #{tpu_custom_call.1} parent=1 // pred_check_branch
      %13 = sbr.rel (0) target = $region9
    $region8: #{tpu_custom_call.1} parent=1 // pred_region
      _
    $region9: #{tpu_custom_call.1} parent=1 // pred_fallthru
      _
    // Predicated region
    $region10: #{tpu_custom_call.1} parent=1 // pred_check
      _
    $region11: #{tpu_custom_call.1} parent=1 // pred_check_branch
      %15 = sbr.rel (0) target = $region13
    $region12: #{tpu_custom_call.1} parent=1 // pred_region
      _
    $region13: #{tpu_custom_call.1} parent=1 // pred_fallthru
      _
    // Predicated region
    $region14: #{tpu_custom_call.1} parent=1 // pred_check
      _
    $region15: #{tpu_custom_call.1} parent=1 // pred_check_branch
      %17 = sbr.rel (0) target = $region17
    $region16: #{tpu_custom_call.1} parent=1 // pred_region
      _
    $region17: #{tpu_custom_call.1} parent=1 // pred_fallthru
      _
    %v19 = vld [vmem:[%s1] sm:$0xf]
    %v20 = vld [vmem:[%s1 + $0x4] sm:$0xf]
    %v21 = vld [vmem:[%s1 + $0x8] sm:$0xf]
    %v22 = vld [vmem:[%s1 + $0xc] sm:$0xf]
    %v23 = vld [vmem:[%s1 + $0x10] sm:$0xf]
    %v24 = vld [vmem:[%s1 + $0x14] sm:$0xf]
    %v25 = vld [vmem:[%s1 + $0x18] sm:$0xf]
    %v26 = vld [vmem:[%s1 + $0x1c] sm:$0xf]
    %v27 = vld [vmem:[%s2] sm:$0xff]
    %v28 = vld [vmem:[%s2 + $0x8] sm:$0xff]
    %v29 = vld [vmem:[%s2 + $0x10] sm:$0xff]
    %v30 = vld [vmem:[%s2 + $0x18] sm:$0xff]
    %v31 = vld [vmem:[%s2 + $0x20] sm:$0xff]
    %v32 = vld [vmem:[%s2 + $0x28] sm:$0xff]
    %v33 = vld [vmem:[%s2 + $0x30] sm:$0xff]
    %v34 = vld [vmem:[%s2 + $0x38] sm:$0xff]
    %v35 = vld [vmem:[%s0] sm:$0xf]
    %v36 = vld [vmem:[%s0 + $0x4] sm:$0xf]
    %v37 = vld [vmem:[%s0 + $0x8] sm:$0xf]
    %v38 = vld [vmem:[%s0 + $0xc] sm:$0xf]
    %v39 = vld [vmem:[%s0 + $0x10] sm:$0xf]
    %v40 = vld [vmem:[%s0 + $0x14] sm:$0xf]
    %v41 = vld [vmem:[%s0 + $0x18] sm:$0xf]
    %v42 = vld [vmem:[%s0 + $0x1c] sm:$0xf]
    %v43 = vld [vmem:[%s0 + $0x20] sm:$0xf]
    %v44 = vld [vmem:[%s0 + $0x24] sm:$0xf]
    %v45 = vld [vmem:[%s0 + $0x28] sm:$0xf]
    %v46 = vld [vmem:[%s0 + $0x2c] sm:$0xf]
    %v47 = vld [vmem:[%s0 + $0x30] sm:$0xf]
    %v48 = vld [vmem:[%s0 + $0x34] sm:$0xf]
    %v49 = vld [vmem:[%s0 + $0x38] sm:$0xf]
    %v50 = vld [vmem:[%s0 + $0x3c] sm:$0xf]
    %v51 = vld [vmem:[%s0 + $0x40] sm:$0xf]
    %v52 = vld [vmem:[%s0 + $0x44] sm:$0xf]
    %v53 = vld [vmem:[%s0 + $0x48] sm:$0xf]
    %v54 = vld [vmem:[%s0 + $0x4c] sm:$0xf]
    %v55 = vld [vmem:[%s0 + $0x50] sm:$0xf]
    %v56 = vld [vmem:[%s0 + $0x54] sm:$0xf]
    %v57 = vld [vmem:[%s0 + $0x58] sm:$0xf]
    %v58 = vld [vmem:[%s0 + $0x5c] sm:$0xf]
    %v59 = vld [vmem:[%s0 + $0x60] sm:$0xf]
    %v60 = vld [vmem:[%s0 + $0x64] sm:$0xf]
    %v61 = vld [vmem:[%s0 + $0x68] sm:$0xf]
    %v62 = vld [vmem:[%s0 + $0x6c] sm:$0xf]
    %v63 = vld [vmem:[%s0 + $0x70] sm:$0xf]
    %v64 = vld [vmem:[%s0 + $0x74] sm:$0xf]
    %v65 = vld [vmem:[%s0 + $0x78] sm:$0xf]
    %v66 = vld [vmem:[%s0 + $0x7c] sm:$0xf]
    %68 = vset.pattern.permute.xlu0 0
    %69 = vperm.xlu0 %68, %v27
    %v70 = vpop.permute.xlu0 %69
    %73 = vset.pattern.permute.xlu0 0
    %74 = vperm.xlu0 %73, %v28
    %v75 = vpop.permute.xlu0 %74
    %78 = vset.pattern.permute.xlu0 0
    %79 = vperm.xlu0 %78, %v29
    %v80 = vpop.permute.xlu0 %79
    %83 = vset.pattern.permute.xlu0 0
    %84 = vperm.xlu0 %83, %v30
    %v85 = vpop.permute.xlu0 %84
    %88 = vset.pattern.permute.xlu0 0
    %89 = vperm.xlu0 %88, %v31
    %v90 = vpop.permute.xlu0 %89
    %93 = vset.pattern.permute.xlu0 0
    %94 = vperm.xlu0 %93, %v32
    %v95 = vpop.permute.xlu0 %94
    %98 = vset.pattern.permute.xlu0 0
    %99 = vperm.xlu0 %98, %v33
    %v100 = vpop.permute.xlu0 %99
    %103 = vset.pattern.permute.xlu0 0
    %104 = vperm.xlu0 %103, %v34
    %v105 = vpop.permute.xlu0 %104
    %v115 = vunpack.c.l.b16 %v19
    %v116 = vunpack.c.l.b16 %v20
    %v117 = vunpack.c.l.b16 %v21
    %v118 = vunpack.c.l.b16 %v22
    %v119 = vunpack.c.l.b16 %v23
    %v120 = vunpack.c.l.b16 %v24
    %v121 = vunpack.c.l.b16 %v25
    %v122 = vunpack.c.l.b16 %v26
    %v123 = vpack.c.b16 %v116, %v115
    %v124 = vpack.c.b16 %v118, %v117
    %v125 = vpack.c.b16 %v120, %v119
    %v126 = vpack.c.b16 %v122, %v121
    %v159 = vunpack.c.l.b16 %v35
    %v160 = vunpack.c.l.b16 %v36
    %v161 = vunpack.c.l.b16 %v37
    %v162 = vunpack.c.l.b16 %v38
    %v163 = vunpack.c.l.b16 %v39
    %v164 = vunpack.c.l.b16 %v40
    %v165 = vunpack.c.l.b16 %v41
    %v166 = vunpack.c.l.b16 %v42
    %v167 = vunpack.c.l.b16 %v43
    %v168 = vunpack.c.l.b16 %v44
    %v169 = vunpack.c.l.b16 %v45
    %v170 = vunpack.c.l.b16 %v46
    %v171 = vunpack.c.l.b16 %v47
    %v172 = vunpack.c.l.b16 %v48
    %v173 = vunpack.c.l.b16 %v49
    %v174 = vunpack.c.l.b16 %v50
    %v175 = vunpack.c.l.b16 %v51
    %v176 = vunpack.c.l.b16 %v52
    %v177 = vunpack.c.l.b16 %v53
    %v178 = vunpack.c.l.b16 %v54
    %v179 = vunpack.c.l.b16 %v55
    %v180 = vunpack.c.l.b16 %v56
    %v181 = vunpack.c.l.b16 %v57
    %v182 = vunpack.c.l.b16 %v58
    %v183 = vunpack.c.l.b16 %v59
    %v184 = vunpack.c.l.b16 %v60
    %v185 = vunpack.c.l.b16 %v61
    %v186 = vunpack.c.l.b16 %v62
    %v187 = vunpack.c.l.b16 %v63
    %v188 = vunpack.c.l.b16 %v64
    %v189 = vunpack.c.l.b16 %v65
    %v190 = vunpack.c.l.b16 %v66
    %v191 = vpack.c.b16 %v160, %v159
    %v192 = vpack.c.b16 %v162, %v161
    %v193 = vpack.c.b16 %v164, %v163
    %v194 = vpack.c.b16 %v166, %v165
    %v195 = vpack.c.b16 %v168, %v167
    %v196 = vpack.c.b16 %v170, %v169
    %v197 = vpack.c.b16 %v172, %v171
    %v198 = vpack.c.b16 %v174, %v173
    %v199 = vpack.c.b16 %v176, %v175
    %v200 = vpack.c.b16 %v178, %v177
    %v201 = vpack.c.b16 %v180, %v179
    %v202 = vpack.c.b16 %v182, %v181
    %v203 = vpack.c.b16 %v184, %v183
    %v204 = vpack.c.b16 %v186, %v185
    %v205 = vpack.c.b16 %v188, %v187
    %v206 = vpack.c.b16 %v190, %v189
    %vm207 = vcmask 523264
    %v209 = vsel %vm207, %v123, 0
    %v212 = vsel %vm207, %v124, 0
    %v215 = vsel %vm207, %v125, 0
    %v218 = vsel %vm207, %v126, 0
    %v221 = vsel %vm207, %v191, 0
    %v224 = vsel %vm207, %v192, 0
    %v227 = vsel %vm207, %v193, 0
    %v230 = vsel %vm207, %v194, 0
    %v233 = vsel %vm207, %v195, 0
    %v236 = vsel %vm207, %v196, 0
    %v239 = vsel %vm207, %v197, 0
    %v242 = vsel %vm207, %v198, 0
    %v245 = vsel %vm207, %v199, 0
    %v248 = vsel %vm207, %v200, 0
    %v251 = vsel %vm207, %v201, 0
    %v254 = vsel %vm207, %v202, 0
    %v257 = vsel %vm207, %v203, 0
    %v260 = vsel %vm207, %v204, 0
    %v263 = vsel %vm207, %v205, 0
    %v266 = vsel %vm207, %v206, 0
    %268 = vmatprep.subr.bf16.mxu0 0
    %269 = vmatpush1.bf16.xpose.msra.mxu0 %v242
    %270 = vmatprep.subr.bf16.mxu0 0
    %271 = vmatpush1.bf16.xpose.msra.mxu0 %v239
    %272 = vmatprep.subr.bf16.mxu0 0
    %273 = vmatpush1.bf16.xpose.msra.mxu0 %v236
    %274 = vmatprep.subr.bf16.mxu0 0
    %275 = vmatpush1.bf16.xpose.msra.mxu0 %v233
    %276 = vmatprep.subr.bf16.mxu0 0
    %277 = vmatpush1.bf16.xpose.msra.mxu0 %v230
    %278 = vmatprep.subr.bf16.mxu0 0
    %279 = vmatpush1.bf16.xpose.msra.mxu0 %v227
    %280 = vmatprep.subr.bf16.mxu0 0
    %281 = vmatpush1.bf16.xpose.msra.mxu0 %v224
    %282 = vmatprep.subr.bf16.mxu0 0
    %283 = vmatpush1.bf16.xpose.msra.mxu0 %v221
    %284 = vmatprep.subr.bf16.mxu0 0
    %285 = vmatpush2.bf16.xpose.msra.mxu0 %v266
    %286 = vmatprep.subr.bf16.mxu0 0
    %287 = vmatpush2.bf16.xpose.msra.mxu0 %v263
    %288 = vmatprep.subr.bf16.mxu0 0
    %289 = vmatpush2.bf16.xpose.msra.mxu0 %v260
    %290 = vmatprep.subr.bf16.mxu0 0
    %291 = vmatpush2.bf16.xpose.msra.mxu0 %v257
    %292 = vmatprep.subr.bf16.mxu0 0
    %293 = vmatpush2.bf16.xpose.msra.mxu0 %v254
    %294 = vmatprep.subr.bf16.mxu0 0
    %295 = vmatpush2.bf16.xpose.msra.mxu0 %v251
    %296 = vmatprep.subr.bf16.mxu0 0
    %297 = vmatpush2.bf16.xpose.msra.mxu0 %v248
    %298 = vmatprep.subr.bf16.mxu0 0
    %299 = vmatpush2.bf16.xpose.msra.mxu0 %v245
    %300 = vmatprep.mubr.bf16.mxu0 0
    %301 = vmatmul.mubr.bf16.gmra.mxu0 %v209
    %v302 = vpop.f32.mrf.mxu0
    %v303 = vadd.f32 %v70, %v302
    %v304 = vpop.f32.mrf.mxu0
    %v305 = vadd.f32 %v70, %v304
    %v306 = vpop.f32.mrf.mxu0
    %v307 = vadd.f32 %v75, %v306
    %v308 = vpop.f32.mrf.mxu0
    %v309 = vadd.f32 %v75, %v308
    %310 = vmatprep.mubr.bf16.mxu0 0
    %311 = vmatmul.mubr.bf16.gmra.mxu0 %v212
    %v312 = vpop.f32.mrf.mxu0
    %v313 = vadd.f32 %v80, %v312
    %v314 = vpop.f32.mrf.mxu0
    %v315 = vadd.f32 %v80, %v314
    %v316 = vpop.f32.mrf.mxu0
    %v317 = vadd.f32 %v85, %v316
    %v318 = vpop.f32.mrf.mxu0
    %v319 = vadd.f32 %v85, %v318
    %320 = vmatprep.mubr.bf16.mxu0 0
    %321 = vmatmul.mubr.bf16.gmra.mxu0 %v215
    %v322 = vpop.f32.mrf.mxu0
    %v323 = vadd.f32 %v90, %v322
    %v324 = vpop.f32.mrf.mxu0
    %v325 = vadd.f32 %v90, %v324
    %v326 = vpop.f32.mrf.mxu0
    %v327 = vadd.f32 %v95, %v326
    %v328 = vpop.f32.mrf.mxu0
    %v329 = vadd.f32 %v95, %v328
    %330 = vmatprep.mubr.bf16.mxu0 0
    %331 = vmatmul.mubr.bf16.gmra.mxu0 %v218
    %v332 = vpop.f32.mrf.mxu0
    %v333 = vadd.f32 %v100, %v332
    %v334 = vpop.f32.mrf.mxu0
    %v335 = vadd.f32 %v100, %v334
    %v336 = vpop.f32.mrf.mxu0
    %v337 = vadd.f32 %v105, %v336
    %v338 = vpop.f32.mrf.mxu0
    %v339 = vadd.f32 %v105, %v338
    %340 = vdwg.mxu0
    %v341 = vmax.f32 %v303, 0.0
    %v342 = vmax.f32 %v305, 0.0
    %v343 = vmax.f32 %v307, 0.0
    %v344 = vmax.f32 %v309, 0.0
    %v345 = vmax.f32 %v313, 0.0
    %v346 = vmax.f32 %v315, 0.0
    %v347 = vmax.f32 %v317, 0.0
    %v348 = vmax.f32 %v319, 0.0
    %v349 = vmax.f32 %v323, 0.0
    %v350 = vmax.f32 %v325, 0.0
    %v351 = vmax.f32 %v327, 0.0
    %v352 = vmax.f32 %v329, 0.0
    %v353 = vmax.f32 %v333, 0.0
    %v354 = vmax.f32 %v335, 0.0
    %v355 = vmax.f32 %v337, 0.0
    %v356 = vmax.f32 %v339, 0.0
    %v357 = vld [vmem:[%s3] sm:$0x3]
    %v359 = vlaneseq
    %v360 = vshrl.u32 %v359, 7
    %v361 = vsub.s32 0, %v360
    %v362 = vrot.slane %v357, %v361
    %v363 = vlaneseq
    %v364 = vshrl.u32 %v363, 7
    %v365 = vsub.s32 1, %v364
    %v366 = vrot.slane %v357, %v365
    %v369 = vmul.f32 %v341, %v362
    %v370 = vmul.f32 %v342, %v366
    %v371 = vmul.f32 %v343, %v362
    %v372 = vmul.f32 %v344, %v366
    %v373 = vmul.f32 %v345, %v362
    %v374 = vmul.f32 %v346, %v366
    %v375 = vmul.f32 %v347, %v362
    %v376 = vmul.f32 %v348, %v366
    %v377 = vmul.f32 %v349, %v362
    %v378 = vmul.f32 %v350, %v366
    %v379 = vmul.f32 %v351, %v362
    %v380 = vmul.f32 %v352, %v366
    %v381 = vmul.f32 %v353, %v362
    %v382 = vmul.f32 %v354, %v366
    %v383 = vmul.f32 %v355, %v362
    %v384 = vmul.f32 %v356, %v366
    %v385 = vpack.c.bf16 %v371, %v369
    %v386 = vpack.c.bf16 %v372, %v370
    %v387 = vpack.c.bf16 %v375, %v373
    %v388 = vpack.c.bf16 %v376, %v374
    %v389 = vpack.c.bf16 %v379, %v377
    %v390 = vpack.c.bf16 %v380, %v378
    %v391 = vpack.c.bf16 %v383, %v381
    %v392 = vpack.c.bf16 %v384, %v382
    %v401 = vunpack.c.l.b16 %v385
    %v402 = vunpack.c.l.b16 %v386
    %v403 = vunpack.c.h.b16 %v385
    %v404 = vunpack.c.h.b16 %v386
    %v405 = vunpack.c.l.b16 %v387
    %v406 = vunpack.c.l.b16 %v388
    %v407 = vunpack.c.h.b16 %v387
    %v408 = vunpack.c.h.b16 %v388
    %v409 = vunpack.c.l.b16 %v389
    %v410 = vunpack.c.l.b16 %v390
    %v411 = vunpack.c.h.b16 %v389
    %v412 = vunpack.c.h.b16 %v390
    %v413 = vunpack.c.l.b16 %v391
    %v414 = vunpack.c.l.b16 %v392
    %v415 = vunpack.c.h.b16 %v391
    %v416 = vunpack.c.h.b16 %v392
    %v417 = vpack.c.b16 %v402, %v401
    %v418 = vpack.c.b16 %v404, %v403
    %v419 = vpack.c.b16 %v406, %v405
    %v420 = vpack.c.b16 %v408, %v407
    %v421 = vpack.c.b16 %v410, %v409
    %v422 = vpack.c.b16 %v412, %v411
    %v423 = vpack.c.b16 %v414, %v413
    %v424 = vpack.c.b16 %v416, %v415
    %433 = vst [vmem:[#allocation2] sm:$0xff] %v417
    %434 = vst [vmem:[#allocation2 + $0x8] sm:$0xff] %v418
    %435 = vst [vmem:[#allocation2 + $0x10] sm:$0xff] %v419
    %436 = vst [vmem:[#allocation2 + $0x18] sm:$0xff] %v420
    %437 = vst [vmem:[#allocation2 + $0x20] sm:$0xff] %v421
    %438 = vst [vmem:[#allocation2 + $0x28] sm:$0xff] %v422
    %439 = vst [vmem:[#allocation2 + $0x30] sm:$0xff] %v423
    %440 = vst [vmem:[#allocation2 + $0x38] sm:$0xff] %v424
    %s441 = scalar_lea.vmem %s0, 128
    %v442 = vld [vmem:[%s441] sm:$0xf]
    %v443 = vld [vmem:[%s441 + $0x4] sm:$0xf]
    %v444 = vld [vmem:[%s441 + $0x8] sm:$0xf]
    %v445 = vld [vmem:[%s441 + $0xc] sm:$0xf]
    %v446 = vld [vmem:[%s441 + $0x10] sm:$0xf]
    %v447 = vld [vmem:[%s441 + $0x14] sm:$0xf]
    %v448 = vld [vmem:[%s441 + $0x18] sm:$0xf]
    %v449 = vld [vmem:[%s441 + $0x1c] sm:$0xf]
    %v450 = vld [vmem:[%s441 + $0x20] sm:$0xf]
    %v451 = vld [vmem:[%s441 + $0x24] sm:$0xf]
    %v452 = vld [vmem:[%s441 + $0x28] sm:$0xf]
    %v453 = vld [vmem:[%s441 + $0x2c] sm:$0xf]
    %v454 = vld [vmem:[%s441 + $0x30] sm:$0xf]
    %v455 = vld [vmem:[%s441 + $0x34] sm:$0xf]
    %v456 = vld [vmem:[%s441 + $0x38] sm:$0xf]
    %v457 = vld [vmem:[%s441 + $0x3c] sm:$0xf]
    %v458 = vld [vmem:[%s441 + $0x40] sm:$0xf]
    %v459 = vld [vmem:[%s441 + $0x44] sm:$0xf]
    %v460 = vld [vmem:[%s441 + $0x48] sm:$0xf]
    %v461 = vld [vmem:[%s441 + $0x4c] sm:$0xf]
    %v462 = vld [vmem:[%s441 + $0x50] sm:$0xf]
    %v463 = vld [vmem:[%s441 + $0x54] sm:$0xf]
    %v464 = vld [vmem:[%s441 + $0x58] sm:$0xf]
    %v465 = vld [vmem:[%s441 + $0x5c] sm:$0xf]
    %v466 = vld [vmem:[%s441 + $0x60] sm:$0xf]
    %v467 = vld [vmem:[%s441 + $0x64] sm:$0xf]
    %v468 = vld [vmem:[%s441 + $0x68] sm:$0xf]
    %v469 = vld [vmem:[%s441 + $0x6c] sm:$0xf]
    %v470 = vld [vmem:[%s441 + $0x70] sm:$0xf]
    %v471 = vld [vmem:[%s441 + $0x74] sm:$0xf]
    %v472 = vld [vmem:[%s441 + $0x78] sm:$0xf]
    %v473 = vld [vmem:[%s441 + $0x7c] sm:$0xf]
    %v506 = vunpack.c.l.b16 %v442
    %v507 = vunpack.c.l.b16 %v443
    %v508 = vunpack.c.l.b16 %v444
    %v509 = vunpack.c.l.b16 %v445
    %v510 = vunpack.c.l.b16 %v446
    %v511 = vunpack.c.l.b16 %v447
    %v512 = vunpack.c.l.b16 %v448
    %v513 = vunpack.c.l.b16 %v449
    %v514 = vunpack.c.l.b16 %v450
    %v515 = vunpack.c.l.b16 %v451
    %v516 = vunpack.c.l.b16 %v452
    %v517 = vunpack.c.l.b16 %v453
    %v518 = vunpack.c.l.b16 %v454
    %v519 = vunpack.c.l.b16 %v455
    %v520 = vunpack.c.l.b16 %v456
    %v521 = vunpack.c.l.b16 %v457
    %v522 = vunpack.c.l.b16 %v458
    %v523 = vunpack.c.l.b16 %v459
    %v524 = vunpack.c.l.b16 %v460
    %v525 = vunpack.c.l.b16 %v461
    %v526 = vunpack.c.l.b16 %v462
    %v527 = vunpack.c.l.b16 %v463
    %v528 = vunpack.c.l.b16 %v464
    %v529 = vunpack.c.l.b16 %v465
    %v530 = vunpack.c.l.b16 %v466
    %v531 = vunpack.c.l.b16 %v467
    %v532 = vunpack.c.l.b16 %v468
    %v533 = vunpack.c.l.b16 %v469
    %v534 = vunpack.c.l.b16 %v470
    %v535 = vunpack.c.l.b16 %v471
    %v536 = vunpack.c.l.b16 %v472
    %v537 = vunpack.c.l.b16 %v473
    %v538 = vpack.c.b16 %v507, %v506
    %v539 = vpack.c.b16 %v509, %v508
    %v540 = vpack.c.b16 %v511, %v510
    %v541 = vpack.c.b16 %v513, %v512
    %v542 = vpack.c.b16 %v515, %v514
    %v543 = vpack.c.b16 %v517, %v516
    %v544 = vpack.c.b16 %v519, %v518
    %v545 = vpack.c.b16 %v521, %v520
    %v546 = vpack.c.b16 %v523, %v522
    %v547 = vpack.c.b16 %v525, %v524
    %v548 = vpack.c.b16 %v527, %v526
    %v549 = vpack.c.b16 %v529, %v528
    %v550 = vpack.c.b16 %v531, %v530
    %v551 = vpack.c.b16 %v533, %v532
    %v552 = vpack.c.b16 %v535, %v534
    %v553 = vpack.c.b16 %v537, %v536
    %v555 = vsel %vm207, %v538, 0
    %v558 = vsel %vm207, %v539, 0
    %v561 = vsel %vm207, %v540, 0
    %v564 = vsel %vm207, %v541, 0
    %v567 = vsel %vm207, %v542, 0
    %v570 = vsel %vm207, %v543, 0
    %v573 = vsel %vm207, %v544, 0
    %v576 = vsel %vm207, %v545, 0
    %v579 = vsel %vm207, %v546, 0
    %v582 = vsel %vm207, %v547, 0
    %v585 = vsel %vm207, %v548, 0
    %v588 = vsel %vm207, %v549, 0
    %v591 = vsel %vm207, %v550, 0
    %v594 = vsel %vm207, %v551, 0
    %v597 = vsel %vm207, %v552, 0
    %v600 = vsel %vm207, %v553, 0
    %602 = vmatprep.subr.bf16.mxu0 0
    %603 = vmatpush1.bf16.xpose.msra.mxu0 %v576
    %604 = vmatprep.subr.bf16.mxu0 0
    %605 = vmatpush1.bf16.xpose.msra.mxu0 %v573
    %606 = vmatprep.subr.bf16.mxu0 0
    %607 = vmatpush1.bf16.xpose.msra.mxu0 %v570
    %608 = vmatprep.subr.bf16.mxu0 0
    %609 = vmatpush1.bf16.xpose.msra.mxu0 %v567
    %610 = vmatprep.subr.bf16.mxu0 0
    %611 = vmatpush1.bf16.xpose.msra.mxu0 %v564
    %612 = vmatprep.subr.bf16.mxu0 0
    %613 = vmatpush1.bf16.xpose.msra.mxu0 %v561
    %614 = vmatprep.subr.bf16.mxu0 0
    %615 = vmatpush1.bf16.xpose.msra.mxu0 %v558
    %616 = vmatprep.subr.bf16.mxu0 0
    %617 = vmatpush1.bf16.xpose.msra.mxu0 %v555
    %618 = vmatprep.subr.bf16.mxu0 0
    %619 = vmatpush2.bf16.xpose.msra.mxu0 %v600
    %620 = vmatprep.subr.bf16.mxu0 0
    %621 = vmatpush2.bf16.xpose.msra.mxu0 %v597
    %622 = vmatprep.subr.bf16.mxu0 0
    %623 = vmatpush2.bf16.xpose.msra.mxu0 %v594
    %624 = vmatprep.subr.bf16.mxu0 0
    %625 = vmatpush2.bf16.xpose.msra.mxu0 %v591
    %626 = vmatprep.subr.bf16.mxu0 0
    %627 = vmatpush2.bf16.xpose.msra.mxu0 %v588
    %628 = vmatprep.subr.bf16.mxu0 0
    %629 = vmatpush2.bf16.xpose.msra.mxu0 %v585
    %630 = vmatprep.subr.bf16.mxu0 0
    %631 = vmatpush2.bf16.xpose.msra.mxu0 %v582
    %632 = vmatprep.subr.bf16.mxu0 0
    %633 = vmatpush2.bf16.xpose.msra.mxu0 %v579
    %634 = vmatprep.mubr.bf16.mxu0 0
    %635 = vmatmul.mubr.bf16.gmra.mxu0 %v209
    %v636 = vpop.f32.mrf.mxu0
    %v637 = vadd.f32 %v70, %v636
    %v638 = vpop.f32.mrf.mxu0
    %v639 = vadd.f32 %v70, %v638
    %v640 = vpop.f32.mrf.mxu0
    %v641 = vadd.f32 %v75, %v640
    %v642 = vpop.f32.mrf.mxu0
    %v643 = vadd.f32 %v75, %v642
    %644 = vmatprep.mubr.bf16.mxu0 0
    %645 = vmatmul.mubr.bf16.gmra.mxu0 %v212
    %v646 = vpop.f32.mrf.mxu0
    %v647 = vadd.f32 %v80, %v646
    %v648 = vpop.f32.mrf.mxu0
    %v649 = vadd.f32 %v80, %v648
    %v650 = vpop.f32.mrf.mxu0
    %v651 = vadd.f32 %v85, %v650
    %v652 = vpop.f32.mrf.mxu0
    %v653 = vadd.f32 %v85, %v652
    %654 = vmatprep.mubr.bf16.mxu0 0
    %655 = vmatmul.mubr.bf16.gmra.mxu0 %v215
    %v656 = vpop.f32.mrf.mxu0
    %v657 = vadd.f32 %v90, %v656
    %v658 = vpop.f32.mrf.mxu0
    %v659 = vadd.f32 %v90, %v658
    %v660 = vpop.f32.mrf.mxu0
    %v661 = vadd.f32 %v95, %v660
    %v662 = vpop.f32.mrf.mxu0
    %v663 = vadd.f32 %v95, %v662
    %664 = vmatprep.mubr.bf16.mxu0 0
    %665 = vmatmul.mubr.bf16.gmra.mxu0 %v218
    %v666 = vpop.f32.mrf.mxu0
    %v667 = vadd.f32 %v100, %v666
    %v668 = vpop.f32.mrf.mxu0
    %v669 = vadd.f32 %v100, %v668
    %v670 = vpop.f32.mrf.mxu0
    %v671 = vadd.f32 %v105, %v670
    %v672 = vpop.f32.mrf.mxu0
    %v673 = vadd.f32 %v105, %v672
    %674 = vdwg.mxu0
    %v675 = vmax.f32 %v637, 0.0
    %v676 = vmax.f32 %v639, 0.0
    %v677 = vmax.f32 %v641, 0.0
    %v678 = vmax.f32 %v643, 0.0
    %v679 = vmax.f32 %v647, 0.0
    %v680 = vmax.f32 %v649, 0.0
    %v681 = vmax.f32 %v651, 0.0
    %v682 = vmax.f32 %v653, 0.0
    %v683 = vmax.f32 %v657, 0.0
    %v684 = vmax.f32 %v659, 0.0
    %v685 = vmax.f32 %v661, 0.0
    %v686 = vmax.f32 %v663, 0.0
    %v687 = vmax.f32 %v667, 0.0
    %v688 = vmax.f32 %v669, 0.0
    %v689 = vmax.f32 %v671, 0.0
    %v690 = vmax.f32 %v673, 0.0
    %s691 = scalar_lea.vmem %s3, 2
    %v692 = vld [vmem:[%s691] sm:$0x3]
    %v694 = vlaneseq
    %v695 = vshrl.u32 %v694, 7
    %v696 = vsub.s32 0, %v695
    %v697 = vrot.slane %v692, %v696
    %v698 = vlaneseq
    %v699 = vshrl.u32 %v698, 7
    %v700 = vsub.s32 1, %v699
    %v701 = vrot.slane %v692, %v700
    %v704 = vmul.f32 %v675, %v697
    %v705 = vmul.f32 %v676, %v701
    %v706 = vmul.f32 %v677, %v697
    %v707 = vmul.f32 %v678, %v701
    %v708 = vmul.f32 %v679, %v697
    %v709 = vmul.f32 %v680, %v701
    %v710 = vmul.f32 %v681, %v697
    %v711 = vmul.f32 %v682, %v701
    %v712 = vmul.f32 %v683, %v697
    %v713 = vmul.f32 %v684, %v701
    %v714 = vmul.f32 %v685, %v697
    %v715 = vmul.f32 %v686, %v701
    %v716 = vmul.f32 %v687, %v697
    %v717 = vmul.f32 %v688, %v701
    %v718 = vmul.f32 %v689, %v697
    %v719 = vmul.f32 %v690, %v701
    %v720 = vpack.c.bf16 %v706, %v704
    %v721 = vpack.c.bf16 %v707, %v705
    %v722 = vpack.c.bf16 %v710, %v708
    %v723 = vpack.c.bf16 %v711, %v709
    %v724 = vpack.c.bf16 %v714, %v712
    %v725 = vpack.c.bf16 %v715, %v713
    %v726 = vpack.c.bf16 %v718, %v716
    %v727 = vpack.c.bf16 %v719, %v717
    %v736 = vunpack.c.l.b16 %v720
    %v737 = vunpack.c.l.b16 %v721
    %v738 = vunpack.c.h.b16 %v720
    %v739 = vunpack.c.h.b16 %v721
    %v740 = vunpack.c.l.b16 %v722
    %v741 = vunpack.c.l.b16 %v723
    %v742 = vunpack.c.h.b16 %v722
    %v743 = vunpack.c.h.b16 %v723
    %v744 = vunpack.c.l.b16 %v724
    %v745 = vunpack.c.l.b16 %v725
    %v746 = vunpack.c.h.b16 %v724
    %v747 = vunpack.c.h.b16 %v725
    %v748 = vunpack.c.l.b16 %v726
    %v749 = vunpack.c.l.b16 %v727
    %v750 = vunpack.c.h.b16 %v726
    %v751 = vunpack.c.h.b16 %v727
    %v752 = vpack.c.b16 %v737, %v736
    %v753 = vpack.c.b16 %v739, %v738
    %v754 = vpack.c.b16 %v741, %v740
    %v755 = vpack.c.b16 %v743, %v742
    %v756 = vpack.c.b16 %v745, %v744
    %v757 = vpack.c.b16 %v747, %v746
    %v758 = vpack.c.b16 %v749, %v748
    %v759 = vpack.c.b16 %v751, %v750
    %s768 = scalar_lea.vmem [#allocation2], 64
    %769 = vst [vmem:[%s768] sm:$0xff] %v752
    %770 = vst [vmem:[%s768 + $0x8] sm:$0xff] %v753
    %771 = vst [vmem:[%s768 + $0x10] sm:$0xff] %v754
    %772 = vst [vmem:[%s768 + $0x18] sm:$0xff] %v755
    %773 = vst [vmem:[%s768 + $0x20] sm:$0xff] %v756
    %774 = vst [vmem:[%s768 + $0x28] sm:$0xff] %v757
    %775 = vst [vmem:[%s768 + $0x30] sm:$0xff] %v758
    %776 = vst [vmem:[%s768 + $0x38] sm:$0xff] %v759
    // Predicated region
    $region18: #{tpu_custom_call.1} parent=1 // pred_check
      _
    $region19: #{tpu_custom_call.1} parent=1 // pred_check_branch
      %778 = sbr.rel (0) target = $region21
    $region20: #{tpu_custom_call.1} parent=1 // pred_region
      %s780 = ssub.s32 2048, 2048
      %781 = vsyncadd [#allocation3], %s780
      %s782 = sshll.u32 [#allocation2], 4
      %s783 = int_to_ptr.vmem [resolvable:$true] %s782
      %788 = dma.vmem_to_hbm [thread:$0]  %s783, 2048, %s4, [#allocation3], 128, 128, 8
    $region21: #{tpu_custom_call.1} parent=1 // pred_fallthru
      _
    // Predicated region
    $region22: #{tpu_custom_call.1} parent=1 // pred_check
      _
    $region23: #{tpu_custom_call.1} parent=1 // pred_check_branch
      %790 = sbr.rel (0) target = $region25
    $region24: #{tpu_custom_call.1} parent=1 // pred_region
      %791 = dma.done [#allocation3], 2048
    $region25: #{tpu_custom_call.1} parent=1 // pred_fallthru
      _
    %792 = vsyncpa [#allocation3], 1

</llo_original>
